<compile_context>
chip_gen: v6e
topology: v6e:2x2x1
jax: 0.10.0
libtpu: 0.0.40
codegen_flags: <defaults>
</compile_context>

<pallas_src>
import functools

import jax
import jax.numpy as jnp
from jax.experimental import pallas as pl
from jax.experimental.pallas import tpu as pltpu

K = 5  # Chebyshev filter size (GConvGRU(node_features, 32, 5) etc.)


# ----------------------------------------------------------------------------
# Pallas kernel
# ----------------------------------------------------------------------------
def _cheb_basis(L, X):
    """Stacked Chebyshev basis [T_0(L)X | ... | T_{K-1}(L)X] -> [N, K*Cin] bf16.

    L: [N, N] bf16.  X: [N, Cin] f32.  The 2*L*T - T recursion accumulates in
    f32; operands of each L-matmul are cast to bf16 for MXU throughput.
    """
    T0 = X
    T1 = jnp.dot(L, X.astype(jnp.bfloat16), preferred_element_type=jnp.float32)
    Ts = [T0, T1]
    for _ in range(2, K):
        T2 = 2.0 * jnp.dot(L, Ts[-1].astype(jnp.bfloat16),
                           preferred_element_type=jnp.float32) - Ts[-2]
        Ts.append(T2)
    return jnp.concatenate(Ts, axis=1).astype(jnp.bfloat16)


def _gru_step_h0(L, X, w_ref, b_ref, c_out):
    """One GConvGRU step specialized to H == 0 (single-snapshot forward).

    w_ref: [K*Cin, 2*c_out] bf16  (z-gate | candidate X-weights, k-major rows)
    b_ref: [1, 2*c_out]    f32   (bxz + bhz | bxh + bhh)

    With H == 0: the H-side ChebConvs reduce to their biases, R is irrelevant
    (it only multiplies H), and H_new = Z*0 + (1 - Z)*H_tilde = (1 - Z)*H_tilde.
    """
    basis = _cheb_basis(L, X)                                     # [N, K*Cin]
    gates = jnp.dot(basis, w_ref[...],
                    preferred_element_type=jnp.float32) + b_ref[...]
    z = jax.nn.sigmoid(gates[:, :c_out])
    h_tilde = jnp.tanh(gates[:, c_out:])
    return (1.0 - z) * h_tilde                                    # f32 [N, c_out]


def fused_forward_kernel(lhat_ref, x_ref,
                         w1_ref, b1_ref,       # gru1 packed
                         w2_ref, b2_ref,       # gru2 packed
                         lw_ref, lb_ref,       # linear head
                         out_ref, *, h1_dim, h2_dim):
    L = lhat_ref[...]                          # bf16 [N, N]
    X = x_ref[...]                             # f32  [N, F]

    h1 = _gru_step_h0(L, X, w1_ref, b1_ref, h1_dim)           # [N, 32]
    # TODO(synk): F.dropout is identity here (eval-mode semantics); training
    # dropout would need pltpu.prng_* inside the kernel.
    x2 = jnp.maximum(h1, 0.0)
    h2 = _gru_step_h0(L, x2, w2_ref, b2_ref, h2_dim)          # [N, 16]
    x3 = jnp.maximum(h2, 0.0)

    logits = jnp.dot(x3.astype(jnp.bfloat16), lw_ref[...],
                     preferred_element_type=jnp.float32) + lb_ref[...]
    # log_softmax over the class (lane) axis.
    m = jnp.max(logits, axis=1, keepdims=True)
    s = logits - m
    lse = jnp.log(jnp.sum(jnp.exp(s), axis=1, keepdims=True))
    out_ref[...] = s - lse                     # [N, num_classes]


# ----------------------------------------------------------------------------
# Wrapper
# ----------------------------------------------------------------------------
_VMEM = pl.BlockSpec(memory_space=pltpu.MemorySpace.VMEM)


def pack_gru_params(p):
    """Pack a GConvGRU's params for the H == 0 single-step specialization.

    Returns W: [K*Cin, 2*Cout] bf16 (update | candidate X-weights, k-major)
            b: [1, 2*Cout]     f32  (bxz + bhz | bxh + bhh)
    The reset-gate weights (xr/hr) and the H-side weights (whz/whr/whh) do not
    contribute when H == 0; only the hz/hh biases do.
    """
    kk, c_in, c_out = p["wxz"].shape
    wz = p["wxz"].reshape(kk * c_in, c_out)
    wh = p["wxh"].reshape(kk * c_in, c_out)
    w = jnp.concatenate([wz, wh], axis=1).astype(jnp.bfloat16)
    b = jnp.concatenate([p["bxz"] + p["bhz"], p["bxh"] + p["bhh"]], axis=1)
    return w, b.astype(jnp.float32)


def recurrent_gcn_forward(x, lhat, params):
    # TODO(synk): hidden state is never carried across snapshots (H=None each
    # call, matching the reference forward); multi-step recurrence would need
    # the general (H != 0) GRU path with the hz/hr/hh weights.
    n = x.shape[0]
    num_classes = params["lin_w"].shape[-1]
    w1, b1 = pack_gru_params(params["gru1"])
    w2, b2 = pack_gru_params(params["gru2"])
    h1_dim = params["gru1"]["wxz"].shape[-1]
    h2_dim = params["gru2"]["wxz"].shape[-1]

    kernel = functools.partial(fused_forward_kernel, h1_dim=h1_dim, h2_dim=h2_dim)
    return pl.pallas_call(
        kernel,
        out_shape=jax.ShapeDtypeStruct((n, num_classes), jnp.float32),
        in_specs=[_VMEM] * 8,
        out_specs=_VMEM,
        compiler_params=pltpu.CompilerParams(vmem_limit_bytes=64 * 1024 * 1024),
    )(lhat.astype(jnp.bfloat16), x.astype(jnp.float32),
      w1, b1, w2, b2,
      params["lin_w"].astype(jnp.bfloat16),
      params["lin_b"].astype(jnp.float32))


# ----------------------------------------------------------------------------
# Glue: dense scaled Laplacian (ChebConv "sym" norm with lambda_max = 2.0)
# ----------------------------------------------------------------------------
def build_lhat(edge_index, edge_weight, num_nodes, lambda_max=2.0):
    src, dst = edge_index[0], edge_index[1]
    A = jnp.zeros((num_nodes, num_nodes), jnp.float32).at[src, dst].add(edge_weight)
    deg = A.sum(axis=1)
    d_inv_sqrt = jnp.where(deg > 0.0, jax.lax.rsqrt(jnp.maximum(deg, 1e-12)), 0.0)
    A_norm = d_inv_sqrt[:, None] * A * d_inv_sqrt[None, :]
    eye = jnp.eye(num_nodes, dtype=jnp.float32)
    L = eye - A_norm                      # sym-normalized Laplacian
    return (2.0 / lambda_max) * L - eye   # L_hat = 2 L / lambda_max - I


def init_cheb(key, c_in, c_out):
    kw, kb = jax.random.split(key)
    scale = 1.0 / jnp.sqrt(jnp.float32(c_in * K))
    return (jax.random.normal(kw, (K, c_in, c_out), jnp.float32) * scale,
            jax.random.normal(kb, (1, c_out), jnp.float32) * 0.1)


def init_gru(key, c_in, c_out):
    keys = jax.random.split(key, 6)
    p = {}
    for name, k, ci in (("xz", keys[0], c_in), ("hz", keys[1], c_out),
                        ("xr", keys[2], c_in), ("hr", keys[3], c_out),
                        ("xh", keys[4], c_in), ("hh", keys[5], c_out)):
        w, b = init_cheb(k, ci, c_out)
        p["w" + name] = w
        p["b" + name] = b
    return p


# ----------------------------------------------------------------------------
if __name__ == "__main__":
    node_features = 8
    num_classes = 4
    num_nodes = 16

    root = jax.random.PRNGKey(0)
    k_x, k_w, k_g1, k_g2, k_lw, k_lb = jax.random.split(root, 6)

    # Node features [N, F]
    x = jax.random.normal(k_x, (num_nodes, node_features), jnp.float32)

    # Undirected ring graph with symmetric positive edge weights.
    i = jnp.arange(num_nodes, dtype=jnp.int32)
    j = (i + 1) % num_nodes
    w_fwd = jax.random.uniform(k_w, (num_nodes,), jnp.float32, 0.5, 1.5)
    edge_index = jnp.stack([jnp.concatenate([i, j]), jnp.concatenate([j, i])])  # [2, 32]
    edge_weight = jnp.concatenate([w_fwd, w_fwd])                               # [32]

    lhat = build_lhat(edge_index, edge_weight, num_nodes)

    params = {
        "gru1": init_gru(k_g1, node_features, 32),
        "gru2": init_gru(k_g2, 32, 16),
        "lin_w": jax.random.normal(k_lw, (16, num_classes), jnp.float32)
                 * (1.0 / jnp.sqrt(16.0)),
        "lin_b": jax.random.normal(k_lb, (1, num_classes), jnp.float32) * 0.1,
    }

    out = jax.block_until_ready(recurrent_gcn_forward(x, lhat, params))

    assert out.shape == (num_nodes, num_classes)
    # rows of log_softmax must exp-sum to 1
    assert jnp.allclose(jnp.exp(out).sum(axis=1), 1.0, atol=1e-3)
    print("KERNEL_OK")
</pallas_src>

<mosaic_0001>
module attributes {stable_mosaic.version = 11 : i64} {
  func.func @fused_forward_kernel(%arg0: memref<16x16xbf16, #tpu.memory_space<vmem>>, %arg1: memref<16x8xf32, #tpu.memory_space<vmem>>, %arg2: memref<40x64xbf16, #tpu.memory_space<vmem>>, %arg3: memref<1x64xf32, #tpu.memory_space<vmem>>, %arg4: memref<160x32xbf16, #tpu.memory_space<vmem>>, %arg5: memref<1x32xf32, #tpu.memory_space<vmem>>, %arg6: memref<16x4xbf16, #tpu.memory_space<vmem>>, %arg7: memref<1x4xf32, #tpu.memory_space<vmem>>, %arg8: memref<16x4xf32, #tpu.memory_space<vmem>>) attributes {dimension_semantics = [], scalar_prefetch = 0 : i64, scratch_operands = 0 : i64, tpu.core_type = #tpu.core_type<tc>} {
    %c0 = arith.constant 0 : index
    %c0_0 = arith.constant 0 : index
    %0 = vector.load %arg0[%c0, %c0_0] : memref<16x16xbf16, #tpu.memory_space<vmem>>, vector<16x16xbf16>
    %c0_1 = arith.constant 0 : index
    %c0_2 = arith.constant 0 : index
    %1 = vector.load %arg1[%c0_1, %c0_2] : memref<16x8xf32, #tpu.memory_space<vmem>>, vector<16x8xf32>
    %2 = arith.truncf %1 : vector<16x8xf32> to vector<16x8xbf16>
    %cst = arith.constant dense<0.000000e+00> : vector<16x8xf32>
    %3 = tpu.matmul %0, %2, %cst {dimension_numbers = #tpu.dot_dimension_numbers<[1], [0], [0], [1], [0, 0, 1, 1], [], []>} : vector<16x16xbf16>, vector<16x8xbf16>, vector<16x8xf32> -> vector<16x8xf32>
    %4 = arith.truncf %3 : vector<16x8xf32> to vector<16x8xbf16>
    %cst_3 = arith.constant dense<0.000000e+00> : vector<16x8xf32>
    %5 = tpu.matmul %0, %4, %cst_3 {dimension_numbers = #tpu.dot_dimension_numbers<[1], [0], [0], [1], [0, 0, 1, 1], [], []>} : vector<16x16xbf16>, vector<16x8xbf16>, vector<16x8xf32> -> vector<16x8xf32>
    %cst_4 = arith.constant 2.000000e+00 : f32
    %6 = vector.broadcast %cst_4 : f32 to vector<16x8xf32>
    %7 = arith.mulf %6, %5 : vector<16x8xf32>
    %8 = arith.subf %7, %1 : vector<16x8xf32>
    %9 = arith.truncf %8 : vector<16x8xf32> to vector<16x8xbf16>
    %cst_5 = arith.constant dense<0.000000e+00> : vector<16x8xf32>
    %10 = tpu.matmul %0, %9, %cst_5 {dimension_numbers = #tpu.dot_dimension_numbers<[1], [0], [0], [1], [0, 0, 1, 1], [], []>} : vector<16x16xbf16>, vector<16x8xbf16>, vector<16x8xf32> -> vector<16x8xf32>
    %cst_6 = arith.constant 2.000000e+00 : f32
    %11 = vector.broadcast %cst_6 : f32 to vector<16x8xf32>
    %12 = arith.mulf %11, %10 : vector<16x8xf32>
    %13 = arith.subf %12, %3 : vector<16x8xf32>
    %14 = arith.truncf %13 : vector<16x8xf32> to vector<16x8xbf16>
    %cst_7 = arith.constant dense<0.000000e+00> : vector<16x8xf32>
    %15 = tpu.matmul %0, %14, %cst_7 {dimension_numbers = #tpu.dot_dimension_numbers<[1], [0], [0], [1], [0, 0, 1, 1], [], []>} : vector<16x16xbf16>, vector<16x8xbf16>, vector<16x8xf32> -> vector<16x8xf32>
    %cst_8 = arith.constant 2.000000e+00 : f32
    %16 = vector.broadcast %cst_8 : f32 to vector<16x8xf32>
    %17 = arith.mulf %16, %15 : vector<16x8xf32>
    %18 = arith.subf %17, %8 : vector<16x8xf32>
    %19 = tpu.concatenate %1, %3, %8, %13, %18 in 1 : vector<16x8xf32>, vector<16x8xf32>, vector<16x8xf32>, vector<16x8xf32>, vector<16x8xf32> -> vector<16x40xf32>
    %20 = arith.truncf %19 : vector<16x40xf32> to vector<16x40xbf16>
    %c0_9 = arith.constant 0 : index
    %c0_10 = arith.constant 0 : index
    %21 = vector.load %arg2[%c0_9, %c0_10] : memref<40x64xbf16, #tpu.memory_space<vmem>>, vector<40x64xbf16>
    %cst_11 = arith.constant dense<0.000000e+00> : vector<16x64xf32>
    %22 = tpu.matmul %20, %21, %cst_11 {dimension_numbers = #tpu.dot_dimension_numbers<[1], [0], [0], [1], [0, 0, 1, 1], [], []>} : vector<16x40xbf16>, vector<40x64xbf16>, vector<16x64xf32> -> vector<16x64xf32>
    %c0_12 = arith.constant 0 : index
    %c0_13 = arith.constant 0 : index
    %23 = vector.load %arg3[%c0_12, %c0_13] : memref<1x64xf32, #tpu.memory_space<vmem>>, vector<1x64xf32>
    %24 = vector.broadcast %23 : vector<1x64xf32> to vector<16x64xf32>
    %25 = arith.addf %22, %24 : vector<16x64xf32>
    %26 = vector.extract_strided_slice %25 {offsets = [0, 0], sizes = [16, 32], strides = [1, 1]} : vector<16x64xf32> to vector<16x32xf32>
    %27 = arith.negf %26 : vector<16x32xf32>
    %28 = math.exp %27 : vector<16x32xf32>
    %cst_14 = arith.constant 1.000000e+00 : f32
    %29 = vector.broadcast %cst_14 : f32 to vector<16x32xf32>
    %30 = arith.addf %29, %28 : vector<16x32xf32>
    %31 = arith.divf %29, %30 : vector<16x32xf32>
    %32 = vector.extract_strided_slice %25 {offsets = [0, 32], sizes = [16, 32], strides = [1, 1]} : vector<16x64xf32> to vector<16x32xf32>
    %33 = math.tanh %32 : vector<16x32xf32>
    %cst_15 = arith.constant 1.000000e+00 : f32
    %34 = vector.broadcast %cst_15 : f32 to vector<16x32xf32>
    %35 = arith.subf %34, %31 : vector<16x32xf32>
    %36 = arith.mulf %35, %33 : vector<16x32xf32>
    %cst_16 = arith.constant 0.000000e+00 : f32
    %37 = vector.broadcast %cst_16 : f32 to vector<16x32xf32>
    %38 = arith.maximumf %36, %37 : vector<16x32xf32>
    %39 = arith.truncf %38 : vector<16x32xf32> to vector<16x32xbf16>
    %cst_17 = arith.constant dense<0.000000e+00> : vector<16x32xf32>
    %40 = tpu.matmul %0, %39, %cst_17 {dimension_numbers = #tpu.dot_dimension_numbers<[1], [0], [0], [1], [0, 0, 1, 1], [], []>} : vector<16x16xbf16>, vector<16x32xbf16>, vector<16x32xf32> -> vector<16x32xf32>
    %41 = arith.truncf %40 : vector<16x32xf32> to vector<16x32xbf16>
    %cst_18 = arith.constant dense<0.000000e+00> : vector<16x32xf32>
    %42 = tpu.matmul %0, %41, %cst_18 {dimension_numbers = #tpu.dot_dimension_numbers<[1], [0], [0], [1], [0, 0, 1, 1], [], []>} : vector<16x16xbf16>, vector<16x32xbf16>, vector<16x32xf32> -> vector<16x32xf32>
    %cst_19 = arith.constant 2.000000e+00 : f32
    %43 = vector.broadcast %cst_19 : f32 to vector<16x32xf32>
    %44 = arith.mulf %43, %42 : vector<16x32xf32>
    %45 = arith.subf %44, %38 : vector<16x32xf32>
    %46 = arith.truncf %45 : vector<16x32xf32> to vector<16x32xbf16>
    %cst_20 = arith.constant dense<0.000000e+00> : vector<16x32xf32>
    %47 = tpu.matmul %0, %46, %cst_20 {dimension_numbers = #tpu.dot_dimension_numbers<[1], [0], [0], [1], [0, 0, 1, 1], [], []>} : vector<16x16xbf16>, vector<16x32xbf16>, vector<16x32xf32> -> vector<16x32xf32>
    %cst_21 = arith.constant 2.000000e+00 : f32
    %48 = vector.broadcast %cst_21 : f32 to vector<16x32xf32>
    %49 = arith.mulf %48, %47 : vector<16x32xf32>
    %50 = arith.subf %49, %40 : vector<16x32xf32>
    %51 = arith.truncf %50 : vector<16x32xf32> to vector<16x32xbf16>
    %cst_22 = arith.constant dense<0.000000e+00> : vector<16x32xf32>
    %52 = tpu.matmul %0, %51, %cst_22 {dimension_numbers = #tpu.dot_dimension_numbers<[1], [0], [0], [1], [0, 0, 1, 1], [], []>} : vector<16x16xbf16>, vector<16x32xbf16>, vector<16x32xf32> -> vector<16x32xf32>
    %cst_23 = arith.constant 2.000000e+00 : f32
    %53 = vector.broadcast %cst_23 : f32 to vector<16x32xf32>
    %54 = arith.mulf %53, %52 : vector<16x32xf32>
    %55 = arith.subf %54, %45 : vector<16x32xf32>
    %56 = tpu.concatenate %38, %40, %45, %50, %55 in 1 : vector<16x32xf32>, vector<16x32xf32>, vector<16x32xf32>, vector<16x32xf32>, vector<16x32xf32> -> vector<16x160xf32>
    %57 = arith.truncf %56 : vector<16x160xf32> to vector<16x160xbf16>
    %c0_24 = arith.constant 0 : index
    %c0_25 = arith.constant 0 : index
    %58 = vector.load %arg4[%c0_24, %c0_25] : memref<160x32xbf16, #tpu.memory_space<vmem>>, vector<160x32xbf16>
    %cst_26 = arith.constant dense<0.000000e+00> : vector<16x32xf32>
    %59 = tpu.matmul %57, %58, %cst_26 {dimension_numbers = #tpu.dot_dimension_numbers<[1], [0], [0], [1], [0, 0, 1, 1], [], []>} : vector<16x160xbf16>, vector<160x32xbf16>, vector<16x32xf32> -> vector<16x32xf32>
    %c0_27 = arith.constant 0 : index
    %c0_28 = arith.constant 0 : index
    %60 = vector.load %arg5[%c0_27, %c0_28] : memref<1x32xf32, #tpu.memory_space<vmem>>, vector<1x32xf32>
    %61 = vector.broadcast %60 : vector<1x32xf32> to vector<16x32xf32>
    %62 = arith.addf %59, %61 : vector<16x32xf32>
    %63 = vector.extract_strided_slice %62 {offsets = [0, 0], sizes = [16, 16], strides = [1, 1]} : vector<16x32xf32> to vector<16x16xf32>
    %64 = arith.negf %63 : vector<16x16xf32>
    %65 = math.exp %64 : vector<16x16xf32>
    %cst_29 = arith.constant 1.000000e+00 : f32
    %66 = vector.broadcast %cst_29 : f32 to vector<16x16xf32>
    %67 = arith.addf %66, %65 : vector<16x16xf32>
    %68 = arith.divf %66, %67 : vector<16x16xf32>
    %69 = vector.extract_strided_slice %62 {offsets = [0, 16], sizes = [16, 16], strides = [1, 1]} : vector<16x32xf32> to vector<16x16xf32>
    %70 = math.tanh %69 : vector<16x16xf32>
    %cst_30 = arith.constant 1.000000e+00 : f32
    %71 = vector.broadcast %cst_30 : f32 to vector<16x16xf32>
    %72 = arith.subf %71, %68 : vector<16x16xf32>
    %73 = arith.mulf %72, %70 : vector<16x16xf32>
    %cst_31 = arith.constant 0.000000e+00 : f32
    %74 = vector.broadcast %cst_31 : f32 to vector<16x16xf32>
    %75 = arith.maximumf %73, %74 : vector<16x16xf32>
    %76 = arith.truncf %75 : vector<16x16xf32> to vector<16x16xbf16>
    %c0_32 = arith.constant 0 : index
    %c0_33 = arith.constant 0 : index
    %77 = vector.load %arg6[%c0_32, %c0_33] : memref<16x4xbf16, #tpu.memory_space<vmem>>, vector<16x4xbf16>
    %cst_34 = arith.constant dense<0.000000e+00> : vector<16x4xf32>
    %78 = tpu.matmul %76, %77, %cst_34 {dimension_numbers = #tpu.dot_dimension_numbers<[1], [0], [0], [1], [0, 0, 1, 1], [], []>} : vector<16x16xbf16>, vector<16x4xbf16>, vector<16x4xf32> -> vector<16x4xf32>
    %c0_35 = arith.constant 0 : index
    %c0_36 = arith.constant 0 : index
    %79 = vector.load %arg7[%c0_35, %c0_36] : memref<1x4xf32, #tpu.memory_space<vmem>>, vector<1x4xf32>
    %80 = vector.broadcast %79 : vector<1x4xf32> to vector<16x4xf32>
    %81 = arith.addf %78, %80 : vector<16x4xf32>
    %cst_37 = arith.constant dense<0xFF800000> : vector<16xf32>
    %82 = vector.multi_reduction <maximumf>, %81, %cst_37 [1] : vector<16x4xf32> to vector<16xf32>
    %83 = vector.shape_cast %82 : vector<16xf32> to vector<16x1xf32>
    %84 = vector.broadcast %83 : vector<16x1xf32> to vector<16x4xf32>
    %85 = arith.subf %81, %84 : vector<16x4xf32>
    %86 = math.exp %85 : vector<16x4xf32>
    %cst_38 = arith.constant dense<0.000000e+00> : vector<16xf32>
    %87 = vector.multi_reduction <add>, %86, %cst_38 [1] : vector<16x4xf32> to vector<16xf32>
    %88 = vector.shape_cast %87 : vector<16xf32> to vector<16x1xf32>
    %89 = math.log %88 : vector<16x1xf32>
    %90 = vector.broadcast %89 : vector<16x1xf32> to vector<16x4xf32>
    %91 = arith.subf %85, %90 : vector<16x4xf32>
    %c0_39 = arith.constant 0 : index
    %c0_40 = arith.constant 0 : index
    %92 = vector.load %arg8[%c0_39, %c0_40] : memref<16x4xf32, #tpu.memory_space<vmem>>, vector<16x4xf32>
    tpu.vector_store %arg8[%c0_39, %c0_40], %91 {strides = array<i32>} : memref<16x4xf32, #tpu.memory_space<vmem>>, vector<16x4xf32>,
    return
  }
}

</mosaic_0001>

<llo_original>
// kernel: tpu_custom_call.1
$region0: #{tpu_custom_call.1}
  #allocation0 [shape = 'u32[]', space=smem, size = 0x4, offset = 0x4, fixed_abs, tag = 'smem constant byte address 0x4 - core index']
  #allocation1 [shape = 'u32[144,128]{1,0:T(1,128)}', space=vmem, size = 0x12000, scoped, tag = 'internal scratch']
  %s0 = inlined_call_operand.vmem [shape: bf16[16,16], index: 0, kind: input, shape index: {}]
  %s1 = inlined_call_operand.vmem [shape: f32[16,8], index: 1, kind: input, shape index: {}]
  %s2 = inlined_call_operand.vmem [shape: bf16[40,64], index: 2, kind: input, shape index: {}]
  %s3 = inlined_call_operand.vmem [shape: f32[1,64], index: 3, kind: input, shape index: {}]
  %s4 = inlined_call_operand.vmem [shape: bf16[160,32], index: 4, kind: input, shape index: {}]
  %s5 = inlined_call_operand.vmem [shape: f32[1,32], index: 5, kind: input, shape index: {}]
  %s6 = inlined_call_operand.vmem [shape: bf16[16,4], index: 6, kind: input, shape index: {}]
  %s7 = inlined_call_operand.vmem [shape: f32[1,4], index: 7, kind: input, shape index: {}]
  %s8 = inlined_call_operand.vmem [shape: f32[16,4], index: 8, kind: output, shape index: {}]
  %s9 = sld [smem:[#allocation0]]
  $region42: #{tpu_custom_call.1} parent=0
    _
  %s11 = ssub.s32 1, %s9
  %s12 = scalar_select 0, %s11, %s9
  // Predicated region
  $region2: #{tpu_custom_call.1} parent=0 // pred_check
    _
  $region3: #{tpu_custom_call.1} parent=0 // pred_check_branch
    %14 = sbr.rel (0) target = $region5
  $region4: #{tpu_custom_call.1} parent=0 // pred_region
    _
  $region5: #{tpu_custom_call.1} parent=0 // pred_fallthru
    _
  // Predicated region
  $region6: #{tpu_custom_call.1} parent=0 // pred_check
    _
  $region7: #{tpu_custom_call.1} parent=0 // pred_check_branch
    %16 = sbr.rel (0) target = $region9
  $region8: #{tpu_custom_call.1} parent=0 // pred_region
    _
  $region9: #{tpu_custom_call.1} parent=0 // pred_fallthru
    _
  // Predicated region
  $region10: #{tpu_custom_call.1} parent=0 // pred_check
    _
  $region11: #{tpu_custom_call.1} parent=0 // pred_check_branch
    %18 = sbr.rel (0) target = $region13
  $region12: #{tpu_custom_call.1} parent=0 // pred_region
    _
  $region13: #{tpu_custom_call.1} parent=0 // pred_fallthru
    _
  // Predicated region
  $region14: #{tpu_custom_call.1} parent=0 // pred_check
    _
  $region15: #{tpu_custom_call.1} parent=0 // pred_check_branch
    %20 = sbr.rel (0) target = $region17
  $region16: #{tpu_custom_call.1} parent=0 // pred_region
    _
  $region17: #{tpu_custom_call.1} parent=0 // pred_fallthru
    _
  // Predicated region
  $region18: #{tpu_custom_call.1} parent=0 // pred_check
    _
  $region19: #{tpu_custom_call.1} parent=0 // pred_check_branch
    %22 = sbr.rel (0) target = $region21
  $region20: #{tpu_custom_call.1} parent=0 // pred_region
    _
  $region21: #{tpu_custom_call.1} parent=0 // pred_fallthru
    _
  // Predicated region
  $region22: #{tpu_custom_call.1} parent=0 // pred_check
    _
  $region23: #{tpu_custom_call.1} parent=0 // pred_check_branch
    %24 = sbr.rel (0) target = $region25
  $region24: #{tpu_custom_call.1} parent=0 // pred_region
    _
  $region25: #{tpu_custom_call.1} parent=0 // pred_fallthru
    _
  // Predicated region
  $region26: #{tpu_custom_call.1} parent=0 // pred_check
    _
  $region27: #{tpu_custom_call.1} parent=0 // pred_check_branch
    %26 = sbr.rel (0) target = $region29
  $region28: #{tpu_custom_call.1} parent=0 // pred_region
    _
  $region29: #{tpu_custom_call.1} parent=0 // pred_fallthru
    _
  // Predicated region
  $region30: #{tpu_custom_call.1} parent=0 // pred_check
    _
  $region31: #{tpu_custom_call.1} parent=0 // pred_check_branch
    %28 = sbr.rel (0) target = $region33
  $region32: #{tpu_custom_call.1} parent=0 // pred_region
    _
  $region33: #{tpu_custom_call.1} parent=0 // pred_fallthru
    _
  %v30 = vld [vmem:[%s0] sm:$0xf]
  %v31 = vld [vmem:[%s0 + $0x4] sm:$0xf]
  %v32 = vld [vmem:[%s1] sm:$0xff]
  %v33 = vld [vmem:[%s1 + $0x8] sm:$0xff]
  %v34 = vpack.c.bf16 %v33, %v32
  %v37 = vunpack.c.l.b16 %v30
  %v38 = vunpack.c.l.b16 %v31
  %v39 = vpack.c.b16 %v38, %v37
  %vm40 = vcmask 130048
  %v42 = vsel %vm40, %v39, 0
  %44 = vmatprep.subr.bf16.mxu0 0
  %45 = vmatpush1.bf16.msra.mxu0 0
  %46 = vmatprep.subr.bf16.mxu0 0
  %47 = vmatpush1.bf16.msra.mxu0 0
  %48 = vmatprep.subr.bf16.mxu0 0
  %49 = vmatpush1.bf16.msra.mxu0 0
  %50 = vmatprep.subr.bf16.mxu0 0
  %51 = vmatpush1.bf16.msra.mxu0 0
  %52 = vmatprep.subr.bf16.mxu0 0
  %53 = vmatpush1.bf16.msra.mxu0 0
  %54 = vmatprep.subr.bf16.mxu0 0
  %55 = vmatpush1.bf16.msra.mxu0 0
  %56 = vmatprep.subr.bf16.mxu0 0
  %57 = vmatpush1.bf16.msra.mxu0 0
  %58 = vmatprep.subr.bf16.mxu0 0
  %59 = vmatpush1.bf16.msra.mxu0 %v34
  %60 = vmatprep.subr.bf16.mxu0 0
  %61 = vmatpush2.bf16.msra.mxu0 0
  %62 = vmatprep.subr.bf16.mxu0 0
  %63 = vmatpush2.bf16.msra.mxu0 0
  %64 = vmatprep.subr.bf16.mxu0 0
  %65 = vmatpush2.bf16.msra.mxu0 0
  %66 = vmatprep.subr.bf16.mxu0 0
  %67 = vmatpush2.bf16.msra.mxu0 0
  %68 = vmatprep.subr.bf16.mxu0 0
  %69 = vmatpush2.bf16.msra.mxu0 0
  %70 = vmatprep.subr.bf16.mxu0 0
  %71 = vmatpush2.bf16.msra.mxu0 0
  %72 = vmatprep.subr.bf16.mxu0 0
  %73 = vmatpush2.bf16.msra.mxu0 0
  %74 = vmatprep.subr.bf16.mxu0 0
  %75 = vmatpush2.bf16.msra.mxu0 0
  %76 = vmatprep.mubr.bf16.mxu0 0
  %77 = vmatmul.mubr.bf16.gmra.mxu0 %v42
  %v78 = vpop.f32.mrf.mxu0
  %v79 = vadd.f32 0.0, %v78
  %v80 = vpop.f32.mrf.mxu0
  %v81 = vpop.f32.mrf.mxu0
  %v82 = vadd.f32 0.0, %v81
  %v83 = vpop.f32.mrf.mxu0
  %84 = vdwg.mxu0
  %v85 = vpack.c.bf16 %v82, %v79
  %86 = vmatprep.subr.bf16.mxu0 0
  %87 = vmatpush1.bf16.msra.mxu0 0
  %88 = vmatprep.subr.bf16.mxu0 0
  %89 = vmatpush1.bf16.msra.mxu0 0
  %90 = vmatprep.subr.bf16.mxu0 0
  %91 = vmatpush1.bf16.msra.mxu0 0
  %92 = vmatprep.subr.bf16.mxu0 0
  %93 = vmatpush1.bf16.msra.mxu0 0
  %94 = vmatprep.subr.bf16.mxu0 0
  %95 = vmatpush1.bf16.msra.mxu0 0
  %96 = vmatprep.subr.bf16.mxu0 0
  %97 = vmatpush1.bf16.msra.mxu0 0
  %98 = vmatprep.subr.bf16.mxu0 0
  %99 = vmatpush1.bf16.msra.mxu0 0
  %100 = vmatprep.subr.bf16.mxu0 0
  %101 = vmatpush1.bf16.msra.mxu0 %v85
  %102 = vmatprep.subr.bf16.mxu0 0
  %103 = vmatpush2.bf16.msra.mxu0 0
  %104 = vmatprep.subr.bf16.mxu0 0
  %105 = vmatpush2.bf16.msra.mxu0 0
  %106 = vmatprep.subr.bf16.mxu0 0
  %107 = vmatpush2.bf16.msra.mxu0 0
  %108 = vmatprep.subr.bf16.mxu0 0
  %109 = vmatpush2.bf16.msra.mxu0 0
  %110 = vmatprep.subr.bf16.mxu0 0
  %111 = vmatpush2.bf16.msra.mxu0 0
  %112 = vmatprep.subr.bf16.mxu0 0
  %113 = vmatpush2.bf16.msra.mxu0 0
  %114 = vmatprep.subr.bf16.mxu0 0
  %115 = vmatpush2.bf16.msra.mxu0 0
  %116 = vmatprep.subr.bf16.mxu0 0
  %117 = vmatpush2.bf16.msra.mxu0 0
  %118 = vmatprep.mubr.bf16.mxu0 0
  %119 = vmatmul.mubr.bf16.gmra.mxu0 %v42
  %v120 = vpop.f32.mrf.mxu0
  %v121 = vadd.f32 0.0, %v120
  %v122 = vpop.f32.mrf.mxu0
  %v123 = vpop.f32.mrf.mxu0
  %v124 = vadd.f32 0.0, %v123
  %v125 = vpop.f32.mrf.mxu0
  %126 = vdwg.mxu0
  %v127 = vmul.f32 %v121, 2.0
  %v128 = vmul.f32 %v124, 2.0
  %v129 = vsub.f32 %v127, %v32
  %v130 = vsub.f32 %v128, %v33
  %v131 = vpack.c.bf16 %v130, %v129
  %132 = vmatprep.subr.bf16.mxu0 0
  %133 = vmatpush1.bf16.msra.mxu0 0
  %134 = vmatprep.subr.bf16.mxu0 0
  %135 = vmatpush1.bf16.msra.mxu0 0
  %136 = vmatprep.subr.bf16.mxu0 0
  %137 = vmatpush1.bf16.msra.mxu0 0
  %138 = vmatprep.subr.bf16.mxu0 0
  %139 = vmatpush1.bf16.msra.mxu0 0
  %140 = vmatprep.subr.bf16.mxu0 0
  %141 = vmatpush1.bf16.msra.mxu0 0
  %142 = vmatprep.subr.bf16.mxu0 0
  %143 = vmatpush1.bf16.msra.mxu0 0
  %144 = vmatprep.subr.bf16.mxu0 0
  %145 = vmatpush1.bf16.msra.mxu0 0
  %146 = vmatprep.subr.bf16.mxu0 0
  %147 = vmatpush1.bf16.msra.mxu0 %v131
  %148 = vmatprep.subr.bf16.mxu0 0
  %149 = vmatpush2.bf16.msra.mxu0 0
  %150 = vmatprep.subr.bf16.mxu0 0
  %151 = vmatpush2.bf16.msra.mxu0 0
  %152 = vmatprep.subr.bf16.mxu0 0
  %153 = vmatpush2.bf16.msra.mxu0 0
  %154 = vmatprep.subr.bf16.mxu0 0
  %155 = vmatpush2.bf16.msra.mxu0 0
  %156 = vmatprep.subr.bf16.mxu0 0
  %157 = vmatpush2.bf16.msra.mxu0 0
  %158 = vmatprep.subr.bf16.mxu0 0
  %159 = vmatpush2.bf16.msra.mxu0 0
  %160 = vmatprep.subr.bf16.mxu0 0
  %161 = vmatpush2.bf16.msra.mxu0 0
  %162 = vmatprep.subr.bf16.mxu0 0
  %163 = vmatpush2.bf16.msra.mxu0 0
  %164 = vmatprep.mubr.bf16.mxu0 0
  %165 = vmatmul.mubr.bf16.gmra.mxu0 %v42
  %v166 = vpop.f32.mrf.mxu0
  %v167 = vadd.f32 0.0, %v166
  %v168 = vpop.f32.mrf.mxu0
  %v169 = vpop.f32.mrf.mxu0
  %v170 = vadd.f32 0.0, %v169
  %v171 = vpop.f32.mrf.mxu0
  %172 = vdwg.mxu0
  %v173 = vmul.f32 %v167, 2.0
  %v174 = vmul.f32 %v170, 2.0
  %v175 = vsub.f32 %v173, %v79
  %v176 = vsub.f32 %v174, %v82
  %v177 = vpack.c.bf16 %v176, %v175
  %178 = vmatprep.subr.bf16.mxu0 0
  %179 = vmatpush1.bf16.msra.mxu0 0
  %180 = vmatprep.subr.bf16.mxu0 0
  %181 = vmatpush1.bf16.msra.mxu0 0
  %182 = vmatprep.subr.bf16.mxu0 0
  %183 = vmatpush1.bf16.msra.mxu0 0
  %184 = vmatprep.subr.bf16.mxu0 0
  %185 = vmatpush1.bf16.msra.mxu0 0
  %186 = vmatprep.subr.bf16.mxu0 0
  %187 = vmatpush1.bf16.msra.mxu0 0
  %188 = vmatprep.subr.bf16.mxu0 0
  %189 = vmatpush1.bf16.msra.mxu0 0
  %190 = vmatprep.subr.bf16.mxu0 0
  %191 = vmatpush1.bf16.msra.mxu0 0
  %192 = vmatprep.subr.bf16.mxu0 0
  %193 = vmatpush1.bf16.msra.mxu0 %v177
  %194 = vmatprep.subr.bf16.mxu0 0
  %195 = vmatpush2.bf16.msra.mxu0 0
  %196 = vmatprep.subr.bf16.mxu0 0
  %197 = vmatpush2.bf16.msra.mxu0 0
  %198 = vmatprep.subr.bf16.mxu0 0
  %199 = vmatpush2.bf16.msra.mxu0 0
  %200 = vmatprep.subr.bf16.mxu0 0
  %201 = vmatpush2.bf16.msra.mxu0 0
  %202 = vmatprep.subr.bf16.mxu0 0
  %203 = vmatpush2.bf16.msra.mxu0 0
  %204 = vmatprep.subr.bf16.mxu0 0
  %205 = vmatpush2.bf16.msra.mxu0 0
  %206 = vmatprep.subr.bf16.mxu0 0
  %207 = vmatpush2.bf16.msra.mxu0 0
  %208 = vmatprep.subr.bf16.mxu0 0
  %209 = vmatpush2.bf16.msra.mxu0 0
  %210 = vmatprep.mubr.bf16.mxu0 0
  %211 = vmatmul.mubr.bf16.gmra.mxu0 %v42
  %v212 = vpop.f32.mrf.mxu0
  %v213 = vadd.f32 0.0, %v212
  %v214 = vpop.f32.mrf.mxu0
  %v215 = vpop.f32.mrf.mxu0
  %v216 = vadd.f32 0.0, %v215
  %v217 = vpop.f32.mrf.mxu0
  %218 = vdwg.mxu0
  %v219 = vmul.f32 %v213, 2.0
  %v220 = vmul.f32 %v216, 2.0
  %v221 = vsub.f32 %v219, %v129
  %v222 = vsub.f32 %v220, %v130
  %225 = vrot.lane.b32.xlu0 %v79, 8
  %v226 = vpop.permute.xlu0 %225
  %227 = vrot.lane.b32.xlu0 %v82, 8
  %v228 = vpop.permute.xlu0 %227
  %233 = vrot.lane.b32.xlu0 %v129, 16
  %v234 = vpop.permute.xlu0 %233
  %235 = vrot.lane.b32.xlu0 %v130, 16
  %v236 = vpop.permute.xlu0 %235
  %241 = vrot.lane.b32.xlu0 %v175, 24
  %v242 = vpop.permute.xlu0 %241
  %243 = vrot.lane.b32.xlu0 %v176, 24
  %v244 = vpop.permute.xlu0 %243
  %249 = vrot.lane.b32.xlu0 %v221, 32
  %v250 = vpop.permute.xlu0 %249
  %251 = vrot.lane.b32.xlu0 %v222, 32
  %v252 = vpop.permute.xlu0 %251
  %vm255 = vcmask 64512
  %v256 = vsel %vm255, %v32, %v226
  %v257 = vsel %vm255, %v33, %v228
  %v258 = vsel %vm40, %v256, %v234
  %v259 = vsel %vm40, %v257, %v236
  %vm260 = vcmask 195584
  %v261 = vsel %vm260, %v258, %v242
  %v262 = vsel %vm260, %v259, %v244
  %vm263 = vcmask 261120
  %v264 = vsel %vm263, %v261, %v250
  %v265 = vsel %vm263, %v262, %v252
  %v266 = vpack.c.bf16 %v265, %v264
  %v267 = vld [vmem:[%s2] sm:$0xf]
  %v268 = vld [vmem:[%s2 + $0x4] sm:$0xf]
  %v269 = vld [vmem:[%s2 + $0x8] sm:$0xf]
  %v270 = vld [vmem:[%s2 + $0xc] sm:$0xf]
  %v271 = vld [vmem:[%s2 + $0x10] sm:$0xf]
  %v272 = vld [vmem:[%s3] sm:$0x1]
  %v274 = vlaneseq
  %v275 = vshrl.u32 %v274, 7
  %v276 = vsub.s32 0, %v275
  %v277 = vrot.slane %v272, %v276
  %v284 = vunpack.c.l.b16 %v267
  %v285 = vunpack.c.l.b16 %v268
  %v286 = vunpack.c.l.b16 %v269
  %v287 = vunpack.c.l.b16 %v270
  %v288 = vunpack.c.l.b16 %v271
  %v289 = vpack.c.b16 %v285, %v284
  %v290 = vpack.c.b16 %v287, %v286
  %v291 = vpack.c.b16 %v288, %v288
  %vm294 = vcmask 326656
  %v296 = vsel %vm294, %v266, 0
  %vm298 = vcmask 1043456
  %v300 = vsel %vm298, %v291, 0
  %302 = vmatprep.subr.bf16.mxu0 0
  %303 = vmatpush1.bf16.msra.mxu0 0
  %304 = vmatprep.subr.bf16.mxu0 0
  %305 = vmatpush1.bf16.msra.mxu0 0
  %306 = vmatprep.subr.bf16.mxu0 0
  %307 = vmatpush1.bf16.msra.mxu0 0
  %308 = vmatprep.subr.bf16.mxu0 0
  %309 = vmatpush1.bf16.msra.mxu0 0
  %310 = vmatprep.subr.bf16.mxu0 0
  %311 = vmatpush1.bf16.msra.mxu0 0
  %312 = vmatprep.subr.bf16.mxu0 0
  %313 = vmatpush1.bf16.msra.mxu0 %v300
  %314 = vmatprep.subr.bf16.mxu0 0
  %315 = vmatpush1.bf16.msra.mxu0 %v290
  %316 = vmatprep.subr.bf16.mxu0 0
  %317 = vmatpush1.bf16.msra.mxu0 %v289
  %318 = vmatprep.subr.bf16.mxu0 0
  %319 = vmatpush2.bf16.msra.mxu0 0
  %320 = vmatprep.subr.bf16.mxu0 0
  %321 = vmatpush2.bf16.msra.mxu0 0
  %322 = vmatprep.subr.bf16.mxu0 0
  %323 = vmatpush2.bf16.msra.mxu0 0
  %324 = vmatprep.subr.bf16.mxu0 0
  %325 = vmatpush2.bf16.msra.mxu0 0
  %326 = vmatprep.subr.bf16.mxu0 0
  %327 = vmatpush2.bf16.msra.mxu0 0
  %328 = vmatprep.subr.bf16.mxu0 0
  %329 = vmatpush2.bf16.msra.mxu0 0
  %330 = vmatprep.subr.bf16.mxu0 0
  %331 = vmatpush2.bf16.msra.mxu0 0
  %332 = vmatprep.subr.bf16.mxu0 0
  %333 = vmatpush2.bf16.msra.mxu0 0
  %334 = vmatprep.mubr.bf16.mxu0 0
  %335 = vmatmul.mubr.bf16.gmra.mxu0 %v296
  %v336 = vpop.f32.mrf.mxu0
  %v337 = vadd.f32 %v277, %v336
  %v338 = vpop.f32.mrf.mxu0
  %v339 = vpop.f32.mrf.mxu0
  %v340 = vadd.f32 %v277, %v339
  %v341 = vpop.f32.mrf.mxu0
  %342 = vdwg.mxu0
  %v343 = vxor.u32 %v337, 2147483648
  %v344 = vxor.u32 %v340, 2147483648
  %v345 = vmul.f32 %v343, 1.442695
  %v346 = vpow.pop %v345
  %v347 = vmul.f32 %v344, 1.442695
  %v348 = vpow.pop %v347
  %v349 = vadd.f32 %v346, 1.0
  %v350 = vadd.f32 %v348, 1.0
  %v351 = vrcp.pop %v349
  %v352 = vmul.f32 1.0, %v351
  %v353 = vrcp.pop %v350
  %v354 = vmul.f32 1.0, %v353
  %v355 = vtanh.pop %v337
  %v356 = vtanh.pop %v340
  %v357 = vsub.f32 1.0, %v352
  %v358 = vsub.f32 1.0, %v354
  %361 = vrot.lane.b32.xlu0 %v355, 96
  %v362 = vpop.permute.xlu0 %361
  %363 = vrot.lane.b32.xlu0 %v356, 96
  %v364 = vpop.permute.xlu0 %363
  %v367 = vmul.f32 %v357, %v362
  %v368 = vmul.f32 %v358, %v364
  %v369 = vmax.f32 %v367, 0.0
  %v370 = vmax.f32 %v368, 0.0
  %v371 = vpack.c.bf16 %v370, %v369
  %372 = vmatprep.subr.bf16.mxu0 0
  %373 = vmatpush1.bf16.msra.mxu0 0
  %374 = vmatprep.subr.bf16.mxu0 0
  %375 = vmatpush1.bf16.msra.mxu0 0
  %376 = vmatprep.subr.bf16.mxu0 0
  %377 = vmatpush1.bf16.msra.mxu0 0
  %378 = vmatprep.subr.bf16.mxu0 0
  %379 = vmatpush1.bf16.msra.mxu0 0
  %380 = vmatprep.subr.bf16.mxu0 0
  %381 = vmatpush1.bf16.msra.mxu0 0
  %382 = vmatprep.subr.bf16.mxu0 0
  %383 = vmatpush1.bf16.msra.mxu0 0
  %384 = vmatprep.subr.bf16.mxu0 0
  %385 = vmatpush1.bf16.msra.mxu0 0
  %386 = vmatprep.subr.bf16.mxu0 0
  %387 = vmatpush1.bf16.msra.mxu0 %v371
  %388 = vmatprep.subr.bf16.mxu0 0
  %389 = vmatpush2.bf16.msra.mxu0 0
  %390 = vmatprep.subr.bf16.mxu0 0
  %391 = vmatpush2.bf16.msra.mxu0 0
  %392 = vmatprep.subr.bf16.mxu0 0
  %393 = vmatpush2.bf16.msra.mxu0 0
  %394 = vmatprep.subr.bf16.mxu0 0
  %395 = vmatpush2.bf16.msra.mxu0 0
  %396 = vmatprep.subr.bf16.mxu0 0
  %397 = vmatpush2.bf16.msra.mxu0 0
  %398 = vmatprep.subr.bf16.mxu0 0
  %399 = vmatpush2.bf16.msra.mxu0 0
  %400 = vmatprep.subr.bf16.mxu0 0
  %401 = vmatpush2.bf16.msra.mxu0 0
  %402 = vmatprep.subr.bf16.mxu0 0
  %403 = vmatpush2.bf16.msra.mxu0 0
  %404 = vmatprep.mubr.bf16.mxu0 0
  %405 = vmatmul.mubr.bf16.gmra.mxu0 %v42
  %v406 = vpop.f32.mrf.mxu0
  %v407 = vadd.f32 0.0, %v406
  %v408 = vpop.f32.mrf.mxu0
  %v409 = vpop.f32.mrf.mxu0
  %v410 = vadd.f32 0.0, %v409
  %v411 = vpop.f32.mrf.mxu0
  %412 = vdwg.mxu0
  %v413 = vpack.c.bf16 %v410, %v407
  %414 = vmatprep.subr.bf16.mxu0 0
  %415 = vmatpush1.bf16.msra.mxu0 0
  %416 = vmatprep.subr.bf16.mxu0 0
  %417 = vmatpush1.bf16.msra.mxu0 0
  %418 = vmatprep.subr.bf16.mxu0 0
  %419 = vmatpush1.bf16.msra.mxu0 0
  %420 = vmatprep.subr.bf16.mxu0 0
  %421 = vmatpush1.bf16.msra.mxu0 0
  %422 = vmatprep.subr.bf16.mxu0 0
  %423 = vmatpush1.bf16.msra.mxu0 0
  %424 = vmatprep.subr.bf16.mxu0 0
  %425 = vmatpush1.bf16.msra.mxu0 0
  %426 = vmatprep.subr.bf16.mxu0 0
  %427 = vmatpush1.bf16.msra.mxu0 0
  %428 = vmatprep.subr.bf16.mxu0 0
  %429 = vmatpush1.bf16.msra.mxu0 %v413
  %430 = vmatprep.subr.bf16.mxu0 0
  %431 = vmatpush2.bf16.msra.mxu0 0
  %432 = vmatprep.subr.bf16.mxu0 0
  %433 = vmatpush2.bf16.msra.mxu0 0
  %434 = vmatprep.subr.bf16.mxu0 0
  %435 = vmatpush2.bf16.msra.mxu0 0
  %436 = vmatprep.subr.bf16.mxu0 0
  %437 = vmatpush2.bf16.msra.mxu0 0
  %438 = vmatprep.subr.bf16.mxu0 0
  %439 = vmatpush2.bf16.msra.mxu0 0
  %440 = vmatprep.subr.bf16.mxu0 0
  %441 = vmatpush2.bf16.msra.mxu0 0
  %442 = vmatprep.subr.bf16.mxu0 0
  %443 = vmatpush2.bf16.msra.mxu0 0
  %444 = vmatprep.subr.bf16.mxu0 0
  %445 = vmatpush2.bf16.msra.mxu0 0
  %446 = vmatprep.mubr.bf16.mxu0 0
  %447 = vmatmul.mubr.bf16.gmra.mxu0 %v42
  %v448 = vpop.f32.mrf.mxu0
  %v449 = vadd.f32 0.0, %v448
  %v450 = vpop.f32.mrf.mxu0
  %v451 = vpop.f32.mrf.mxu0
  %v452 = vadd.f32 0.0, %v451
  %v453 = vpop.f32.mrf.mxu0
  %454 = vdwg.mxu0
  %v455 = vmul.f32 %v449, 2.0
  %v456 = vmul.f32 %v452, 2.0
  %v457 = vsub.f32 %v455, %v369
  %v458 = vsub.f32 %v456, %v370
  %v459 = vpack.c.bf16 %v458, %v457
  %460 = vmatprep.subr.bf16.mxu0 0
  %461 = vmatpush1.bf16.msra.mxu0 0
  %462 = vmatprep.subr.bf16.mxu0 0
  %463 = vmatpush1.bf16.msra.mxu0 0
  %464 = vmatprep.subr.bf16.mxu0 0
  %465 = vmatpush1.bf16.msra.mxu0 0
  %466 = vmatprep.subr.bf16.mxu0 0
  %467 = vmatpush1.bf16.msra.mxu0 0
  %468 = vmatprep.subr.bf16.mxu0 0
  %469 = vmatpush1.bf16.msra.mxu0 0
  %470 = vmatprep.subr.bf16.mxu0 0
  %471 = vmatpush1.bf16.msra.mxu0 0
  %472 = vmatprep.subr.bf16.mxu0 0
  %473 = vmatpush1.bf16.msra.mxu0 0
  %474 = vmatprep.subr.bf16.mxu0 0
  %475 = vmatpush1.bf16.msra.mxu0 %v459
  %476 = vmatprep.subr.bf16.mxu0 0
  %477 = vmatpush2.bf16.msra.mxu0 0
  %478 = vmatprep.subr.bf16.mxu0 0
  %479 = vmatpush2.bf16.msra.mxu0 0
  %480 = vmatprep.subr.bf16.mxu0 0
  %481 = vmatpush2.bf16.msra.mxu0 0
  %482 = vmatprep.subr.bf16.mxu0 0
  %483 = vmatpush2.bf16.msra.mxu0 0
  %484 = vmatprep.subr.bf16.mxu0 0
  %485 = vmatpush2.bf16.msra.mxu0 0
  %486 = vmatprep.subr.bf16.mxu0 0
  %487 = vmatpush2.bf16.msra.mxu0 0
  %488 = vmatprep.subr.bf16.mxu0 0
  %489 = vmatpush2.bf16.msra.mxu0 0
  %490 = vmatprep.subr.bf16.mxu0 0
  %491 = vmatpush2.bf16.msra.mxu0 0
  %492 = vmatprep.mubr.bf16.mxu0 0
  %493 = vmatmul.mubr.bf16.gmra.mxu0 %v42
  %v494 = vpop.f32.mrf.mxu0
  %v495 = vadd.f32 0.0, %v494
  %v496 = vpop.f32.mrf.mxu0
  %v497 = vpop.f32.mrf.mxu0
  %v498 = vadd.f32 0.0, %v497
  %v499 = vpop.f32.mrf.mxu0
  %500 = vdwg.mxu0
  %v501 = vmul.f32 %v495, 2.0
  %v502 = vmul.f32 %v498, 2.0
  %v503 = vsub.f32 %v501, %v407
  %v504 = vsub.f32 %v502, %v410
  %v505 = vpack.c.bf16 %v504, %v503
  %506 = vmatprep.subr.bf16.mxu0 0
  %507 = vmatpush1.bf16.msra.mxu0 0
  %508 = vmatprep.subr.bf16.mxu0 0
  %509 = vmatpush1.bf16.msra.mxu0 0
  %510 = vmatprep.subr.bf16.mxu0 0
  %511 = vmatpush1.bf16.msra.mxu0 0
  %512 = vmatprep.subr.bf16.mxu0 0
  %513 = vmatpush1.bf16.msra.mxu0 0
  %514 = vmatprep.subr.bf16.mxu0 0
  %515 = vmatpush1.bf16.msra.mxu0 0
  %516 = vmatprep.subr.bf16.mxu0 0
  %517 = vmatpush1.bf16.msra.mxu0 0
  %518 = vmatprep.subr.bf16.mxu0 0
  %519 = vmatpush1.bf16.msra.mxu0 0
  %520 = vmatprep.subr.bf16.mxu0 0
  %521 = vmatpush1.bf16.msra.mxu0 %v505
  %522 = vmatprep.subr.bf16.mxu0 0
  %523 = vmatpush2.bf16.msra.mxu0 0
  %524 = vmatprep.subr.bf16.mxu0 0
  %525 = vmatpush2.bf16.msra.mxu0 0
  %526 = vmatprep.subr.bf16.mxu0 0
  %527 = vmatpush2.bf16.msra.mxu0 0
  %528 = vmatprep.subr.bf16.mxu0 0
  %529 = vmatpush2.bf16.msra.mxu0 0
  %530 = vmatprep.subr.bf16.mxu0 0
  %531 = vmatpush2.bf16.msra.mxu0 0
  %532 = vmatprep.subr.bf16.mxu0 0
  %533 = vmatpush2.bf16.msra.mxu0 0
  %534 = vmatprep.subr.bf16.mxu0 0
  %535 = vmatpush2.bf16.msra.mxu0 0
  %536 = vmatprep.subr.bf16.mxu0 0
  %537 = vmatpush2.bf16.msra.mxu0 0
  %538 = vmatprep.mubr.bf16.mxu0 0
  %539 = vmatmul.mubr.bf16.gmra.mxu0 %v42
  %v540 = vpop.f32.mrf.mxu0
  %v541 = vadd.f32 0.0, %v540
  %v542 = vpop.f32.mrf.mxu0
  %v543 = vpop.f32.mrf.mxu0
  %v544 = vadd.f32 0.0, %v543
  %v545 = vpop.f32.mrf.mxu0
  %546 = vdwg.mxu0
  %v547 = vmul.f32 %v541, 2.0
  %v548 = vmul.f32 %v544, 2.0
  %v549 = vsub.f32 %v547, %v457
  %v550 = vsub.f32 %v548, %v458
  %553 = vrot.lane.b32.xlu0 %v407, 32
  %v554 = vpop.permute.xlu0 %553
  %555 = vrot.lane.b32.xlu0 %v410, 32
  %v556 = vpop.permute.xlu0 %555
  %561 = vrot.lane.b32.xlu0 %v457, 64
  %v562 = vpop.permute.xlu0 %561
  %563 = vrot.lane.b32.xlu0 %v458, 64
  %v564 = vpop.permute.xlu0 %563
  %569 = vrot.lane.b32.xlu0 %v503, 96
  %v570 = vpop.permute.xlu0 %569
  %571 = vrot.lane.b32.xlu0 %v504, 96
  %v572 = vpop.permute.xlu0 %571
  %v575 = vsel %vm263, %v369, %v554
  %v576 = vsel %vm263, %v370, %v556
  %vm577 = vcmask 523264
  %v578 = vsel %vm577, %v575, %v562
  %v579 = vsel %vm577, %v576, %v564
  %vm580 = vcmask 785408
  %v581 = vsel %vm580, %v578, %v570
  %v582 = vsel %vm580, %v579, %v572
  %v583 = vpack.c.bf16 %v582, %v581
  %v584 = vpack.c.bf16 %v550, %v549
  %v585 = vld [vmem:[%s4] sm:$0xf]
  %v586 = vld [vmem:[%s4 + $0x4] sm:$0xf]
  %v587 = vld [vmem:[%s4 + $0x8] sm:$0xf]
  %v588 = vld [vmem:[%s4 + $0xc] sm:$0xf]
  %v589 = vld [vmem:[%s4 + $0x10] sm:$0xf]
  %v590 = vld [vmem:[%s4 + $0x14] sm:$0xf]
  %v591 = vld [vmem:[%s4 + $0x18] sm:$0xf]
  %v592 = vld [vmem:[%s4 + $0x1c] sm:$0xf]
  %v593 = vld [vmem:[%s4 + $0x20] sm:$0xf]
  %v594 = vld [vmem:[%s4 + $0x24] sm:$0xf]
  %v595 = vld [vmem:[%s4 + $0x28] sm:$0xf]
  %v596 = vld [vmem:[%s4 + $0x2c] sm:$0xf]
  %v597 = vld [vmem:[%s4 + $0x30] sm:$0xf]
  %v598 = vld [vmem:[%s4 + $0x34] sm:$0xf]
  %v599 = vld [vmem:[%s4 + $0x38] sm:$0xf]
  %v600 = vld [vmem:[%s4 + $0x3c] sm:$0xf]
  %v601 = vld [vmem:[%s4 + $0x40] sm:$0xf]
  %v602 = vld [vmem:[%s4 + $0x44] sm:$0xf]
  %v603 = vld [vmem:[%s4 + $0x48] sm:$0xf]
  %v604 = vld [vmem:[%s4 + $0x4c] sm:$0xf]
  %v605 = vld [vmem:[%s5] sm:$0x1]
  %v607 = vlaneseq
  %v608 = vshrl.u32 %v607, 7
  %v609 = vsub.s32 0, %v608
  %v610 = vrot.slane %v605, %v609
  %v632 = vunpack.c.l.b16 %v585
  %v633 = vunpack.c.l.b16 %v586
  %v634 = vunpack.c.l.b16 %v587
  %v635 = vunpack.c.l.b16 %v588
  %v636 = vunpack.c.l.b16 %v589
  %v637 = vunpack.c.l.b16 %v590
  %v638 = vunpack.c.l.b16 %v591
  %v639 = vunpack.c.l.b16 %v592
  %v640 = vunpack.c.l.b16 %v593
  %v641 = vunpack.c.l.b16 %v594
  %v642 = vunpack.c.l.b16 %v595
  %v643 = vunpack.c.l.b16 %v596
  %v644 = vunpack.c.l.b16 %v597
  %v645 = vunpack.c.l.b16 %v598
  %v646 = vunpack.c.l.b16 %v599
  %v647 = vunpack.c.l.b16 %v600
  %v648 = vunpack.c.l.b16 %v601
  %v649 = vunpack.c.l.b16 %v602
  %v650 = vunpack.c.l.b16 %v603
  %v651 = vunpack.c.l.b16 %v604
  %v652 = vpack.c.b16 %v633, %v632
  %v653 = vpack.c.b16 %v635, %v634
  %v654 = vpack.c.b16 %v637, %v636
  %v655 = vpack.c.b16 %v639, %v638
  %v656 = vpack.c.b16 %v641, %v640
  %v657 = vpack.c.b16 %v643, %v642
  %v658 = vpack.c.b16 %v645, %v644
  %v659 = vpack.c.b16 %v647, %v646
  %v660 = vpack.c.b16 %v649, %v648
  %v661 = vpack.c.b16 %v651, %v650
  %v673 = vsel %vm263, %v584, 0
  %675 = vmatprep.subr.bf16.mxu0 0
  %676 = vmatpush1.bf16.msra.mxu0 %v659
  %677 = vmatprep.subr.bf16.mxu0 0
  %678 = vmatpush1.bf16.msra.mxu0 %v658
  %679 = vmatprep.subr.bf16.mxu0 0
  %680 = vmatpush1.bf16.msra.mxu0 %v657
  %681 = vmatprep.subr.bf16.mxu0 0
  %682 = vmatpush1.bf16.msra.mxu0 %v656
  %683 = vmatprep.subr.bf16.mxu0 0
  %684 = vmatpush1.bf16.msra.mxu0 %v655
  %685 = vmatprep.subr.bf16.mxu0 0
  %686 = vmatpush1.bf16.msra.mxu0 %v654
  %687 = vmatprep.subr.bf16.mxu0 0
  %688 = vmatpush1.bf16.msra.mxu0 %v653
  %689 = vmatprep.subr.bf16.mxu0 0
  %690 = vmatpush1.bf16.msra.mxu0 %v652
  %691 = vmatprep.subr.bf16.mxu0 0
  %692 = vmatpush2.bf16.msra.mxu0 0
  %693 = vmatprep.subr.bf16.mxu0 0
  %694 = vmatpush2.bf16.msra.mxu0 0
  %695 = vmatprep.subr.bf16.mxu0 0
  %696 = vmatpush2.bf16.msra.mxu0 0
  %697 = vmatprep.subr.bf16.mxu0 0
  %698 = vmatpush2.bf16.msra.mxu0 0
  %699 = vmatprep.subr.bf16.mxu0 0
  %700 = vmatpush2.bf16.msra.mxu0 0
  %701 = vmatprep.subr.bf16.mxu0 0
  %702 = vmatpush2.bf16.msra.mxu0 0
  %703 = vmatprep.subr.bf16.mxu0 0
  %704 = vmatpush2.bf16.msra.mxu0 %v661
  %705 = vmatprep.subr.bf16.mxu0 0
  %706 = vmatpush2.bf16.msra.mxu0 %v660
  %707 = vmatprep.mubr.bf16.mxu0 %v673
  %708 = vmatmul.mubr.bf16.gmra.mxu0 %v583
  %v709 = vpop.f32.mrf.mxu0
  %v710 = vadd.f32 %v610, %v709
  %v711 = vpop.f32.mrf.mxu0
  %v712 = vpop.f32.mrf.mxu0
  %v713 = vadd.f32 %v610, %v712
  %v714 = vpop.f32.mrf.mxu0
  %715 = vdwg.mxu0
  %v716 = vxor.u32 %v710, 2147483648
  %v717 = vxor.u32 %v713, 2147483648
  %v718 = vmul.f32 %v716, 1.442695
  %v719 = vpow.pop %v718
  %v720 = vmul.f32 %v717, 1.442695
  %v721 = vpow.pop %v720
  %v722 = vadd.f32 %v719, 1.0
  %v723 = vadd.f32 %v721, 1.0
  %v724 = vrcp.pop %v722
  %v725 = vmul.f32 1.0, %v724
  %v726 = vrcp.pop %v723
  %v727 = vmul.f32 1.0, %v726
  %v728 = vtanh.pop %v710
  %v729 = vtanh.pop %v713
  %v730 = vsub.f32 1.0, %v725
  %v731 = vsub.f32 1.0, %v727
  %734 = vrot.lane.b32.xlu0 %v728, 112
  %v735 = vpop.permute.xlu0 %734
  %736 = vrot.lane.b32.xlu0 %v729, 112
  %v737 = vpop.permute.xlu0 %736
  %v740 = vmul.f32 %v730, %v735
  %v741 = vmul.f32 %v731, %v737
  %v742 = vmax.f32 %v740, 0.0
  %v743 = vmax.f32 %v741, 0.0
  %v744 = vpack.c.bf16 %v743, %v742
  %v745 = vld [vmem:[%s6] sm:$0xf]
  %v746 = vld [vmem:[%s6 + $0x4] sm:$0xf]
  %v747 = vld [vmem:[%s7] sm:$0x1]
  %v749 = vlaneseq
  %v750 = vshrl.u32 %v749, 7
  %v751 = vsub.s32 0, %v750
  %v752 = vrot.slane %v747, %v751
  %v756 = vunpack.c.l.b16 %v745
  %v757 = vunpack.c.l.b16 %v746
  %v758 = vpack.c.b16 %v757, %v756
  %v761 = vsel %vm40, %v744, 0
  %763 = vmatprep.subr.bf16.mxu0 0
  %764 = vmatpush1.bf16.msra.mxu0 0
  %765 = vmatprep.subr.bf16.mxu0 0
  %766 = vmatpush1.bf16.msra.mxu0 0
  %767 = vmatprep.subr.bf16.mxu0 0
  %768 = vmatpush1.bf16.msra.mxu0 0
  %769 = vmatprep.subr.bf16.mxu0 0
  %770 = vmatpush1.bf16.msra.mxu0 0
  %771 = vmatprep.subr.bf16.mxu0 0
  %772 = vmatpush1.bf16.msra.mxu0 0
  %773 = vmatprep.subr.bf16.mxu0 0
  %774 = vmatpush1.bf16.msra.mxu0 0
  %775 = vmatprep.subr.bf16.mxu0 0
  %776 = vmatpush1.bf16.msra.mxu0 0
  %777 = vmatprep.subr.bf16.mxu0 0
  %778 = vmatpush1.bf16.msra.mxu0 %v758
  %779 = vmatprep.subr.bf16.mxu0 0
  %780 = vmatpush2.bf16.msra.mxu0 0
  %781 = vmatprep.subr.bf16.mxu0 0
  %782 = vmatpush2.bf16.msra.mxu0 0
  %783 = vmatprep.subr.bf16.mxu0 0
  %784 = vmatpush2.bf16.msra.mxu0 0
  %785 = vmatprep.subr.bf16.mxu0 0
  %786 = vmatpush2.bf16.msra.mxu0 0
  %787 = vmatprep.subr.bf16.mxu0 0
  %788 = vmatpush2.bf16.msra.mxu0 0
  %789 = vmatprep.subr.bf16.mxu0 0
  %790 = vmatpush2.bf16.msra.mxu0 0
  %791 = vmatprep.subr.bf16.mxu0 0
  %792 = vmatpush2.bf16.msra.mxu0 0
  %793 = vmatprep.subr.bf16.mxu0 0
  %794 = vmatpush2.bf16.msra.mxu0 0
  %795 = vmatprep.mubr.bf16.mxu0 0
  %796 = vmatmul.mubr.bf16.gmra.mxu0 %v761
  %v797 = vpop.f32.mrf.mxu0
  %v798 = vadd.f32 %v752, %v797
  %v799 = vpop.f32.mrf.mxu0
  %v800 = vpop.f32.mrf.mxu0
  %v801 = vadd.f32 %v752, %v800
  %v802 = vpop.f32.mrf.mxu0
  %803 = vdwg.mxu0
  %vm804 = vcmask 31744
  %v805 = vsel %vm804, %v798, -inf
  %806 = vmax.xlane.f32.xlu0 %v805
  %v807 = vpop.xlane.xlu0 %806
  %v808 = vsel %vm804, %v801, -inf
  %809 = vmax.xlane.f32.xlu0 %v808
  %v810 = vpop.xlane.xlu0 %809
  %v811 = vsub.f32 %v798, %v807
  %v812 = vsub.f32 %v801, %v810
  %v813 = vmul.f32 %v811, 1.442695
  %v814 = vpow.pop %v813
  %v815 = vmul.f32 %v812, 1.442695
  %v816 = vpow.pop %v815
  %v817 = vsel %vm804, %v814, 0.0
  %818 = vadd.xlane.f32.xlu0 %v817
  %v819 = vpop.xlane.xlu0 %818
  %v820 = vsel %vm804, %v816, 0.0
  %821 = vadd.xlane.f32.xlu0 %v820
  %v822 = vpop.xlane.xlu0 %821
  %v823 = vlog2.pop %v819
  %v824 = vmul.f32 %v823, 0.6931472
  %v825 = vlog2.pop %v822
  %v826 = vmul.f32 %v825, 0.6931472
  %v827 = vsub.f32 %v811, %v824
  %v828 = vsub.f32 %v812, %v826
  %829 = vst.msk [vmem:[%s8] sm:$0xff] %vm804, %v827
  %830 = vst.msk [vmem:[%s8 + $0x8] sm:$0xff] %vm804, %v828
  // Predicated region
  $region34: #{tpu_custom_call.1} parent=0 // pred_check
    _
  $region35: #{tpu_custom_call.1} parent=0 // pred_check_branch
    %832 = sbr.rel (0) target = $region37
  $region36: #{tpu_custom_call.1} parent=0 // pred_region
    _
  $region37: #{tpu_custom_call.1} parent=0 // pred_fallthru
    _
  // Predicated region
  $region38: #{tpu_custom_call.1} parent=0 // pred_check
    _
  $region39: #{tpu_custom_call.1} parent=0 // pred_check_branch
    %834 = sbr.rel (0) target = $region41
  $region40: #{tpu_custom_call.1} parent=0 // pred_region
    _
  $region41: #{tpu_custom_call.1} parent=0 // pred_fallthru
    _

</llo_original>
